<compile_context>
chip_gen: v7x
topology: tpu7x:2x2x1
jax: 0.10.0
libtpu: 0.0.40
codegen_flags: <defaults>
</compile_context>

<pallas_src>
import jax
import jax.numpy as jnp
from jax.experimental import pallas as pl
from jax.experimental.pallas import tpu as pltpu


def _mm_affine_kernel(x_ref, scale_ref, bias_ref, o_ref):
    # x_ref:     (C, block_n) lane-dense tile
    # scale_ref: (C, 1) per-channel scale (resident, constant index_map)
    # bias_ref:  (C, 1) per-channel bias
    o_ref[...] = x_ref[...] * scale_ref[...] + bias_ref[...]


def _choose_block_n(C, N, max_block_bytes=1 << 20):
    """Pick a lane-dense block width (multiple of 128) of ~<=1 MiB per block."""
    if N % 128 != 0:
        # TODO(synk): pad N up to a multiple of 128 for huge non-aligned inputs;
        # for now fall back to a single full-extent block (valid BlockSpec).
        return N
    max_lanes = max(128, ((max_block_bytes // 4) // max(C, 1)) // 128 * 128)
    if N <= max_lanes:
        return N
    # Prefer an even divisor of N (multiple of 128) to avoid a masked tail block.
    for bn in range(max_lanes, 127, -128):
        if N % bn == 0:
            return bn
    return max_lanes


def moment_matching_transform(x, current_mean, current_std,
                              pretrain_mean, pretrain_std):
    """Apply moment matching to x of shape [C, H, W] (float32)."""
    C, H, W = x.shape
    N = H * W

    # Parameter folding (glue, plain JAX) — mirrors the PyTorch __init__.
    cur_mean = jnp.asarray(current_mean, jnp.float32).reshape(C, 1)
    cur_std = jnp.asarray(current_std, jnp.float32).reshape(C, 1)
    pre_mean = jnp.asarray(pretrain_mean, jnp.float32).reshape(C, 1)
    pre_std = jnp.asarray(pretrain_std, jnp.float32).reshape(C, 1)

    scale = (pre_std / cur_std).astype(x.dtype)                 # (C, 1)
    bias = (pre_mean - cur_mean * (pre_std / cur_std)).astype(x.dtype)  # (C, 1)

    # Lane-dense 2D view: last dim = H*W (multiple of 128 for typical images).
    x2 = jnp.reshape(x, (C, N))

    block_n = _choose_block_n(C, N)
    grid = (pl.cdiv(N, block_n),)

    grid_spec = pltpu.PrefetchScalarGridSpec(
        num_scalar_prefetch=0,
        grid=grid,
        in_specs=[
            # x: all channels, a lane-dense slab of the spatial axis per step.
            pl.BlockSpec((C, block_n), lambda j: (0, j)),
            # scale / bias: constant block index -> DMA'd once, stays resident.
            pl.BlockSpec((C, 1), lambda j: (0, 0)),
            pl.BlockSpec((C, 1), lambda j: (0, 0)),
        ],
        out_specs=pl.BlockSpec((C, block_n), lambda j: (0, j)),
    )

    out2 = pl.pallas_call(
        _mm_affine_kernel,
        out_shape=jax.ShapeDtypeStruct((C, N), x.dtype),
        grid_spec=grid_spec,
        compiler_params=pltpu.CompilerParams(
            dimension_semantics=("parallel",)),
    )(x2, scale, bias)

    return jnp.reshape(out2, (C, H, W))


if __name__ == "__main__":
    # Deterministic "statistics" (synthetic, no checkpoint load).
    current_data_mean = [0.10, 0.20, 0.30, 0.40]
    current_data_std = [0.50, 0.60, 0.70, 0.80]
    pretraining_data_mean = [0.485, 0.456, 0.406, 0.420]
    pretraining_data_std = [0.229, 0.224, 0.225, 0.230]

    def ref_fn(x):
        C = x.shape[0]
        cm = jnp.asarray(current_data_mean, jnp.float32).reshape(C, 1, 1)
        cs = jnp.asarray(current_data_std, jnp.float32).reshape(C, 1, 1)
        pm = jnp.asarray(pretraining_data_mean, jnp.float32).reshape(C, 1, 1)
        ps = jnp.asarray(pretraining_data_std, jnp.float32).reshape(C, 1, 1)
        return (x - cm) * (ps / cs) + pm

    key = jax.random.PRNGKey(0)
    k_small, k_big = jax.random.split(key)

    # Small case matching the module's [C, H, W] input (single-block path).
    x_small = jax.random.normal(k_small, (4, 16, 16), dtype=jnp.float32)
    out_small = jax.block_until_ready(moment_matching_transform(
        x_small, current_data_mean, current_data_std,
        pretraining_data_mean, pretraining_data_std))
    assert out_small.shape == x_small.shape and out_small.dtype == jnp.float32
    assert jnp.allclose(out_small, ref_fn(x_small), atol=1e-5, rtol=1e-5)

    # Larger case exercising the multi-block, lane-dense grid path.
    x_big = jax.random.normal(k_big, (4, 512, 512), dtype=jnp.float32)
    out_big = jax.block_until_ready(moment_matching_transform(
        x_big, current_data_mean, current_data_std,
        pretraining_data_mean, pretraining_data_std))
    assert out_big.shape == x_big.shape and out_big.dtype == jnp.float32
    assert jnp.allclose(out_big, ref_fn(x_big), atol=1e-5, rtol=1e-5)

    print("KERNEL_OK")
</pallas_src>

<mosaic_0001>
module attributes {stable_mosaic.version = 11 : i64} {
  func.func @_mm_affine_kernel(%arg0: i32, %arg1: memref<4x256xf32, #tpu.memory_space<vmem>>, %arg2: memref<4x1xf32, #tpu.memory_space<vmem>>, %arg3: memref<4x1xf32, #tpu.memory_space<vmem>>, %arg4: memref<4x256xf32, #tpu.memory_space<vmem>>) attributes {dimension_semantics = [#tpu.dimension_semantics<parallel>], iteration_bounds = array<i64: 1>, scalar_prefetch = 0 : i64, scratch_operands = 0 : i64, tpu.core_type = #tpu.core_type<tc>, window_params = [{transform_indices = @transform_0, window_bounds = array<i64: 4, 256>}, {pipeline_mode = #tpu.pipeline_mode<synchronous>, transform_indices = @transform_1, window_bounds = array<i64: 4, 1>}, {pipeline_mode = #tpu.pipeline_mode<synchronous>, transform_indices = @transform_2, window_bounds = array<i64: 4, 1>}, {transform_indices = @transform_3, window_bounds = array<i64: 4, 256>}]} {
    %c0 = arith.constant 0 : index
    %c0_0 = arith.constant 0 : index
    %0 = vector.load %arg1[%c0, %c0_0] : memref<4x256xf32, #tpu.memory_space<vmem>>, vector<4x256xf32>
    %c0_1 = arith.constant 0 : index
    %c0_2 = arith.constant 0 : index
    %1 = vector.load %arg2[%c0_1, %c0_2] : memref<4x1xf32, #tpu.memory_space<vmem>>, vector<4x1xf32>
    %2 = vector.broadcast %1 : vector<4x1xf32> to vector<4x256xf32>
    %3 = arith.mulf %0, %2 : vector<4x256xf32>
    %c0_3 = arith.constant 0 : index
    %c0_4 = arith.constant 0 : index
    %4 = vector.load %arg3[%c0_3, %c0_4] : memref<4x1xf32, #tpu.memory_space<vmem>>, vector<4x1xf32>
    %5 = vector.broadcast %4 : vector<4x1xf32> to vector<4x256xf32>
    %6 = arith.addf %3, %5 : vector<4x256xf32>
    %c0_5 = arith.constant 0 : index
    %c0_6 = arith.constant 0 : index
    %7 = vector.load %arg4[%c0_5, %c0_6] : memref<4x256xf32, #tpu.memory_space<vmem>>, vector<4x256xf32>
    tpu.vector_store %arg4[%c0_5, %c0_6], %6 {strides = array<i32>} : memref<4x256xf32, #tpu.memory_space<vmem>>, vector<4x256xf32>,
    return
  }
  func.func @transform_0(%arg0: i32) -> (i32, i32) {
    %c0_i32 = arith.constant 0 : i32
    %c0_i32_0 = arith.constant 0 : i32
    return %c0_i32, %arg0 : i32, i32
  }
  func.func @transform_1(%arg0: i32) -> (i32, i32) {
    %c0_i32 = arith.constant 0 : i32
    %c0_i32_0 = arith.constant 0 : i32
    %c0_i32_1 = arith.constant 0 : i32
    return %c0_i32, %c0_i32_0 : i32, i32
  }
  func.func @transform_2(%arg0: i32) -> (i32, i32) {
    %c0_i32 = arith.constant 0 : i32
    %c0_i32_0 = arith.constant 0 : i32
    %c0_i32_1 = arith.constant 0 : i32
    return %c0_i32, %c0_i32_0 : i32, i32
  }
  func.func @transform_3(%arg0: i32) -> (i32, i32) {
    %c0_i32 = arith.constant 0 : i32
    %c0_i32_0 = arith.constant 0 : i32
    return %c0_i32, %arg0 : i32, i32
  }
}

</mosaic_0001>

<llo_original>
// kernel: tpu_custom_call.1
$region0: #{tpu_custom_call.1}
  #allocation0 [shape = 'u32[]', space=smem, size = 0x4, offset = 0x4, fixed_abs, tag = 'smem constant byte address 0x4 - core index']
  #allocation1 [shape = 'u32[144,128]{1,0:T(1,128)}', space=vmem, size = 0x12000, scoped, tag = 'internal scratch']
  %s0 = inlined_call_operand.vmem [shape: f32[4,256], index: 0, kind: input, shape index: {}]
  %s1 = inlined_call_operand.vmem [shape: f32[4,1], index: 1, kind: input, shape index: {}]
  %s2 = inlined_call_operand.vmem [shape: f32[4,1], index: 2, kind: input, shape index: {}]
  %s3 = inlined_call_operand.hbm [shape: f32[4,256], index: 3, kind: output, shape index: {}]
  %s4 = sld [smem:[#allocation0]]
  $region22: #{tpu_custom_call.1} parent=0
    _
  %s6 = ssub.s32 1, %s4
  %s7 = scalar_select 0, %s6, %s4
  $region1: #{tpu_custom_call.1} parent=0
    #allocation2 [shape = 'u8[4096]{0}', space=vmem, size = 0x1000, scoped, tag = 'output window, operand 0, single buffered']
    #allocation3 [shape = 's32[1]{0}', space=sflag, size = 0x4, scoped, tag = 'scoped memory for tpu_custom_call.1']
    %8 = vsyncpa [#allocation3], 0
    // Predicated region
    $region2: #{tpu_custom_call.1} parent=1 // pred_check
      _
    $region3: #{tpu_custom_call.1} parent=1 // pred_check_branch
      %10 = sbr.rel (0) target = $region5
    $region4: #{tpu_custom_call.1} parent=1 // pred_region
      _
    $region5: #{tpu_custom_call.1} parent=1 // pred_fallthru
      _
    // Predicated region
    $region6: #{tpu_custom_call.1} parent=1 // pred_check
      _
    $region7: #{tpu_custom_call.1} parent=1 // pred_check_branch
      %12 = sbr.rel (0) target = $region9
    $region8: #{tpu_custom_call.1} parent=1 // pred_region
      _
    $region9: #{tpu_custom_call.1} parent=1 // pred_fallthru
      _
    // Predicated region
    $region10: #{tpu_custom_call.1} parent=1 // pred_check
      _
    $region11: #{tpu_custom_call.1} parent=1 // pred_check_branch
      %14 = sbr.rel (0) target = $region13
    $region12: #{tpu_custom_call.1} parent=1 // pred_region
      _
    $region13: #{tpu_custom_call.1} parent=1 // pred_fallthru
      _
    %v15 = vld [vmem:[%s0] sm:$0xff]
    %v16 = vld [vmem:[%s1] sm:$0xf]
    %18 = vset.pattern.permute.xlu0 0
    %19 = vperm.xlu0 %18, %v16
    %v20 = vpop.permute.xlu0 %19
    %v22 = vunpack.c.l.s4 839922192
    %v23 = vunpack.c.0.s8 %v22
    %v24 = vlaneseq
    %v25 = vshrl.u32 %v24, 7
    %v26 = vsub.s32 %v23, %v25
    %v27 = vrot.slane %v20, %v26
    %v29 = vmul.f32 %v15, %v27
    %v30 = vld [vmem:[%s2] sm:$0xf]
    %32 = vset.pattern.permute.xlu0 0
    %33 = vperm.xlu0 %32, %v30
    %v34 = vpop.permute.xlu0 %33
    %v36 = vunpack.c.l.s4 839922192
    %v37 = vunpack.c.0.s8 %v36
    %v38 = vlaneseq
    %v39 = vshrl.u32 %v38, 7
    %v40 = vsub.s32 %v37, %v39
    %v41 = vrot.slane %v34, %v40
    %v43 = vadd.f32 %v29, %v41
    %44 = vst [vmem:[#allocation2] sm:$0xff] %v43
    // Predicated region
    $region14: #{tpu_custom_call.1} parent=1 // pred_check
      _
    $region15: #{tpu_custom_call.1} parent=1 // pred_check_branch
      %46 = sbr.rel (0) target = $region17
    $region16: #{tpu_custom_call.1} parent=1 // pred_region
      %s48 = ssub.s32 128, 128
      %49 = vsyncadd [#allocation3], %s48
      %s51 = sshll.u32 [#allocation2], 4
      %s52 = int_to_ptr.vmem [resolvable:$true] %s51
      %54 = dma.vmem_to_hbm [thread:$0]  %s52, 128, %s3, [#allocation3]
    $region17: #{tpu_custom_call.1} parent=1 // pred_fallthru
      _
    // Predicated region
    $region18: #{tpu_custom_call.1} parent=1 // pred_check
      _
    $region19: #{tpu_custom_call.1} parent=1 // pred_check_branch
      %56 = sbr.rel (0) target = $region21
    $region20: #{tpu_custom_call.1} parent=1 // pred_region
      %57 = dma.done [#allocation3], 128
    $region21: #{tpu_custom_call.1} parent=1 // pred_fallthru
      _
    %58 = vsyncpa [#allocation3], 1

</llo_original>
